<compile_context>
chip_gen: v7x
topology: tpu7x:2x2x1
jax: 0.10.0
libtpu: 0.0.40
codegen_flags: <defaults>
</compile_context>

<pallas_src>
import functools

import jax
import jax.numpy as jnp
from jax.experimental import pallas as pl
from jax.experimental.pallas import tpu as pltpu


_LANE = 128
_MAX_TILE_COLS = 32768  # (5, 32768) f32 block = 640 KiB per input stream


def _round_up(x, m):
    return ((x + m - 1) // m) * m


def _smooth_l1_cols_kernel(pred_ref, target_ref, out_ref, *,
                           beta, inv_half_beta, half_beta, scale):
    """Unweighted per-sample (per-column) smooth-L1 loss, transposed layout.

    pred_ref / target_ref: (D, tc) blocks; out_ref: (1, tc).
    """
    p = pred_ref[...].astype(jnp.float32)
    t = target_ref[...].astype(jnp.float32)
    diff = jnp.abs(p - t)
    loss = jnp.where(diff < beta, inv_half_beta * diff * diff, diff - half_beta)
    per_sample = jnp.sum(loss, axis=0, keepdims=True)       # (1, tc) sublane reduce
    if scale != 1.0:                                         # static Python constant
        per_sample = per_sample * scale
    out_ref[...] = per_sample


def _smooth_l1_cols_weighted_kernel(pred_ref, target_ref, w_ref, out_ref, *,
                                    beta, inv_half_beta, half_beta, scale):
    """Weighted per-sample (per-column) smooth-L1 loss, transposed layout.

    pred_ref / target_ref: (D, tc) blocks; w_ref: (1, tc); out_ref: (1, tc).
    """
    p = pred_ref[...].astype(jnp.float32)
    t = target_ref[...].astype(jnp.float32)
    diff = jnp.abs(p - t)
    loss = jnp.where(diff < beta, inv_half_beta * diff * diff, diff - half_beta)
    per_sample = jnp.sum(loss, axis=0, keepdims=True)        # (1, tc)
    w = w_ref[...].astype(jnp.float32)
    if scale != 1.0:                                          # static Python constant
        w = w * scale
    out_ref[...] = per_sample * w


def _per_sample_losses(pred, target, weight, *, beta, loss_weight,
                       max_tile_cols=_MAX_TILE_COLS):
    """loss_weight * weight * smooth_l1(pred, target).sum(1), shape (1, N_pad)."""
    N, D = pred.shape

    # Pad N up to a lane-aligned tile size; padded columns are exact zeros
    # (pred == target == 0 -> loss 0) so they never affect results.
    n_lane = _round_up(N, _LANE)
    tc = min(n_lane, max_tile_cols)
    n_pad = _round_up(N, tc)
    num_blocks = n_pad // tc
    pad_n = n_pad - N

    # Transposed, lane-dense layout: (D, N_pad).
    pred_t = jnp.pad(pred.astype(jnp.float32), ((0, pad_n), (0, 0))).T
    target_t = jnp.pad(target.astype(jnp.float32), ((0, pad_n), (0, 0))).T

    const = dict(beta=float(beta),
                 inv_half_beta=0.5 / float(beta),
                 half_beta=0.5 * float(beta),
                 scale=float(loss_weight))

    data_spec = pl.BlockSpec((D, tc), lambda i: (0, i))
    row_spec = pl.BlockSpec((1, tc), lambda i: (0, i))
    out_shape = jax.ShapeDtypeStruct((1, n_pad), jnp.float32)
    cparams = pltpu.CompilerParams(
        dimension_semantics=("parallel",),
        vmem_limit_bytes=32 * 1024 * 1024)

    if weight is None:
        out = pl.pallas_call(
            functools.partial(_smooth_l1_cols_kernel, **const),
            out_shape=out_shape,
            grid=(num_blocks,),
            in_specs=[data_spec, data_spec],
            out_specs=row_spec,
            compiler_params=cparams,
        )(pred_t, target_t)
    else:
        w_row = jnp.pad(jnp.reshape(weight, (1, N)).astype(jnp.float32),
                        ((0, 0), (0, pad_n)))
        out = pl.pallas_call(
            functools.partial(_smooth_l1_cols_weighted_kernel, **const),
            out_shape=out_shape,
            grid=(num_blocks,),
            in_specs=[data_spec, data_spec, row_spec],
            out_specs=row_spec,
            compiler_params=cparams,
        )(pred_t, target_t, w_row)
    return out, N


def smooth_l1_loss(pred, target, weight=None, *, beta=1.0, reduction='mean',
                   avg_factor=None, loss_weight=1.0):
    assert beta > 0
    assert pred.shape == target.shape and pred.size > 0
    assert pred.ndim == 2

    per_sample, N = _per_sample_losses(pred, target, weight, beta=beta,
                                       loss_weight=loss_weight)

    if reduction == 'none':
        # NOTE: returns float32 regardless of input dtype (loss values only).
        return per_sample[0, :N]
    if reduction == 'sum':
        assert avg_factor is None, "avg_factor only valid with reduction='mean'"
        return jnp.sum(per_sample)
    if reduction == 'mean':
        denom = float(avg_factor) if avg_factor is not None else float(N)
        return jnp.sum(per_sample) / denom
    raise ValueError(f"unsupported reduction: {reduction}")


class SmoothL1Loss:
    """JAX/Pallas equivalent of the PyTorch SmoothL1Loss module (no params)."""

    def __init__(self, beta=1.0, reduction='mean', loss_weight=1.0):
        self.beta = beta
        self.reduction = reduction
        self.loss_weight = loss_weight

    def __call__(self, pred, target, weight=None, avg_factor=None,
                 reduction_override=None):
        assert reduction_override in (None, 'none', 'mean', 'sum')
        reduction = reduction_override if reduction_override else self.reduction
        # TODO(synk): the original's stochastic debug print (random.random()<1e-4)
        # has no kernel equivalent and is omitted.
        return smooth_l1_loss(pred, target, weight, beta=self.beta,
                              reduction=reduction, avg_factor=avg_factor,
                              loss_weight=self.loss_weight)


def _reference(pred, target, weight, beta, reduction, avg_factor, loss_weight):
    diff = jnp.abs(pred - target)
    loss = jnp.where(diff < beta, 0.5 * diff * diff / beta, diff - 0.5 * beta)
    loss = jnp.sum(loss, axis=1)
    if weight is not None:
        loss = loss * weight
    if reduction == 'none':
        return loss_weight * loss
    if reduction == 'sum':
        return loss_weight * jnp.sum(loss)
    denom = avg_factor if avg_factor is not None else loss.shape[0]
    return loss_weight * jnp.sum(loss) / denom


if __name__ == "__main__":
    key = jax.random.PRNGKey(0)
    kp, kt, kw = jax.random.split(key, 3)

    N, D = 64, 5                      # 64 anchors x 5 rotated-box parameters
    pred = jax.random.normal(kp, (N, D), dtype=jnp.float32)
    target = jax.random.normal(kt, (N, D), dtype=jnp.float32)
    weight = jax.random.uniform(kw, (N,), dtype=jnp.float32)

    loss_mod = SmoothL1Loss(beta=1.0, reduction='mean', loss_weight=1.0)

    # default path: weighted mean reduction
    out_mean = loss_mod(pred, target, weight=weight)
    jax.block_until_ready(out_mean)
    ref_mean = _reference(pred, target, weight, 1.0, 'mean', None, 1.0)
    assert jnp.allclose(out_mean, ref_mean, rtol=1e-5, atol=1e-5)

    # 'none' reduction path (per-sample losses)
    out_none = loss_mod(pred, target, weight=weight, reduction_override='none')
    jax.block_until_ready(out_none)
    ref_none = _reference(pred, target, weight, 1.0, 'none', None, 1.0)
    assert out_none.shape == (N,)
    assert jnp.allclose(out_none, ref_none, rtol=1e-5, atol=1e-5)

    # 'sum' with avg_factor=None, no weight (exercises the no-weight kernel)
    out_sum = loss_mod(pred, target, reduction_override='sum')
    jax.block_until_ready(out_sum)
    ref_sum = _reference(pred, target, None, 1.0, 'sum', None, 1.0)
    assert jnp.allclose(out_sum, ref_sum, rtol=1e-5, atol=1e-5)

    # non-128-multiple N, beta != 1, loss_weight != 1, avg_factor path
    loss_mod2 = SmoothL1Loss(beta=0.5, reduction='mean', loss_weight=2.0)
    N2 = 200
    kp2, kt2, kw2 = jax.random.split(jax.random.PRNGKey(1), 3)
    pred2 = jax.random.normal(kp2, (N2, D), dtype=jnp.float32)
    target2 = jax.random.normal(kt2, (N2, D), dtype=jnp.float32)
    weight2 = jax.random.uniform(kw2, (N2,), dtype=jnp.float32)
    out2 = loss_mod2(pred2, target2, weight=weight2, avg_factor=37.0)
    jax.block_until_ready(out2)
    ref2 = _reference(pred2, target2, weight2, 0.5, 'mean', 37.0, 2.0)
    assert jnp.allclose(out2, ref2, rtol=1e-5, atol=1e-5)

    print("KERNEL_OK")
</pallas_src>

<mosaic_0001>
module attributes {stable_mosaic.version = 11 : i64} {
  func.func @_smooth_l1_cols_weighted_kernel(%arg0: i32, %arg1: memref<5x128xf32, #tpu.memory_space<vmem>>, %arg2: memref<5x128xf32, #tpu.memory_space<vmem>>, %arg3: memref<1x128xf32, #tpu.memory_space<vmem>>, %arg4: memref<1x128xf32, #tpu.memory_space<vmem>>) attributes {dimension_semantics = [#tpu.dimension_semantics<parallel>], iteration_bounds = array<i64: 1>, scalar_prefetch = 0 : i64, scratch_operands = 0 : i64, tpu.core_type = #tpu.core_type<tc>, window_params = [{transform_indices = @transform_0, window_bounds = array<i64: 5, 128>}, {transform_indices = @transform_1, window_bounds = array<i64: 5, 128>}, {transform_indices = @transform_2, window_bounds = array<i64: 1, 128>}, {transform_indices = @transform_3, window_bounds = array<i64: 1, 128>}]} {
    %c0 = arith.constant 0 : index
    %c0_0 = arith.constant 0 : index
    %0 = vector.load %arg1[%c0, %c0_0] : memref<5x128xf32, #tpu.memory_space<vmem>>, vector<5x128xf32>
    %c0_1 = arith.constant 0 : index
    %c0_2 = arith.constant 0 : index
    %1 = vector.load %arg2[%c0_1, %c0_2] : memref<5x128xf32, #tpu.memory_space<vmem>>, vector<5x128xf32>
    %2 = arith.subf %0, %1 : vector<5x128xf32>
    %3 = math.absf %2 : vector<5x128xf32>
    %cst = arith.constant 1.000000e+00 : f32
    %4 = vector.broadcast %cst : f32 to vector<5x128xf32>
    %5 = arith.cmpf olt, %3, %4 : vector<5x128xf32>
    %cst_3 = arith.constant 5.000000e-01 : f32
    %6 = vector.broadcast %cst_3 : f32 to vector<5x128xf32>
    %7 = arith.mulf %6, %3 : vector<5x128xf32>
    %8 = arith.mulf %7, %3 : vector<5x128xf32>
    %cst_4 = arith.constant 5.000000e-01 : f32
    %9 = vector.broadcast %cst_4 : f32 to vector<5x128xf32>
    %10 = arith.subf %3, %9 : vector<5x128xf32>
    %11 = arith.select %5, %8, %10 : vector<5x128xi1>, vector<5x128xf32>
    %cst_5 = arith.constant dense<0.000000e+00> : vector<128xf32>
    %12 = vector.multi_reduction <add>, %11, %cst_5 [0] : vector<5x128xf32> to vector<128xf32>
    %13 = vector.shape_cast %12 : vector<128xf32> to vector<1x128xf32>
    %c0_6 = arith.constant 0 : index
    %c0_7 = arith.constant 0 : index
    %14 = vector.load %arg3[%c0_6, %c0_7] : memref<1x128xf32, #tpu.memory_space<vmem>>, vector<1x128xf32>
    %15 = arith.mulf %13, %14 : vector<1x128xf32>
    %c0_8 = arith.constant 0 : index
    %c0_9 = arith.constant 0 : index
    %16 = vector.load %arg4[%c0_8, %c0_9] : memref<1x128xf32, #tpu.memory_space<vmem>>, vector<1x128xf32>
    tpu.vector_store %arg4[%c0_8, %c0_9], %15 {strides = array<i32>} : memref<1x128xf32, #tpu.memory_space<vmem>>, vector<1x128xf32>,
    return
  }
  func.func @transform_0(%arg0: i32) -> (i32, i32) {
    %c0_i32 = arith.constant 0 : i32
    %c0_i32_0 = arith.constant 0 : i32
    return %c0_i32, %arg0 : i32, i32
  }
  func.func @transform_1(%arg0: i32) -> (i32, i32) {
    %c0_i32 = arith.constant 0 : i32
    %c0_i32_0 = arith.constant 0 : i32
    return %c0_i32, %arg0 : i32, i32
  }
  func.func @transform_2(%arg0: i32) -> (i32, i32) {
    %c0_i32 = arith.constant 0 : i32
    %c0_i32_0 = arith.constant 0 : i32
    return %c0_i32, %arg0 : i32, i32
  }
  func.func @transform_3(%arg0: i32) -> (i32, i32) {
    %c0_i32 = arith.constant 0 : i32
    %c0_i32_0 = arith.constant 0 : i32
    return %c0_i32, %arg0 : i32, i32
  }
}

</mosaic_0001>

<llo_original>
// kernel: tpu_custom_call.1
$region0: #{tpu_custom_call.1}
  #allocation0 [shape = 'u32[]', space=smem, size = 0x4, offset = 0x4, fixed_abs, tag = 'smem constant byte address 0x4 - core index']
  #allocation1 [shape = 'u32[144,128]{1,0:T(1,128)}', space=vmem, size = 0x12000, scoped, tag = 'internal scratch']
  %s0 = inlined_call_operand.hbm [shape: f32[5,128], index: 0, kind: input, shape index: {}]
  %s1 = inlined_call_operand.hbm [shape: f32[5,128], index: 1, kind: input, shape index: {}]
  %s2 = inlined_call_operand.vmem [shape: f32[1,128], index: 2, kind: input, shape index: {}]
  %s3 = inlined_call_operand.hbm [shape: f32[1,128], index: 3, kind: output, shape index: {}]
  %s4 = sld [smem:[#allocation0]]
  $region30: #{tpu_custom_call.1} parent=0
    _
  %s6 = ssub.s32 1, %s4
  %s7 = scalar_select 0, %s6, %s4
  $region1: #{tpu_custom_call.1} parent=0
    #allocation2 [shape = 'u8[4096]{0}', space=vmem, size = 0x1000, scoped, tag = 'input window, operand 0, single buffered']
    #allocation3 [shape = 's32[1]{0}', space=sflag, size = 0x4, scoped, tag = 'scoped memory for tpu_custom_call.1']
    #allocation4 [shape = 's32[1]{0}', space=sflag, size = 0x4, scoped, tag = 'scoped memory for tpu_custom_call.1']
    #allocation5 [shape = 'u8[4096]{0}', space=vmem, size = 0x1000, scoped, tag = 'input window, operand 1, single buffered']
    #allocation6 [shape = 's32[1]{0}', space=sflag, size = 0x4, scoped, tag = 'scoped memory for tpu_custom_call.1']
    #allocation7 [shape = 'u8[512]{0}', space=vmem, size = 0x400, scoped, tag = 'output window, operand 0, single buffered']
    %8 = vsyncpa [#allocation3], 0
    %9 = vsyncpa [#allocation6], 0
    %10 = vsyncpa [#allocation4], 0
    // Predicated region
    $region2: #{tpu_custom_call.1} parent=1 // pred_check
      _
    $region3: #{tpu_custom_call.1} parent=1 // pred_check_branch
      %12 = sbr.rel (0) target = $region5
    $region4: #{tpu_custom_call.1} parent=1 // pred_region
      %s14 = ssub.s32 128, 128
      %15 = vsyncadd [#allocation3], %s14
      %s17 = sshll.u32 [#allocation2], 4
      %s18 = int_to_ptr.vmem [resolvable:$true] %s17
      %20 = dma.hbm_to_vmem [thread:$0]  %s0, 128, %s18, [#allocation3]
    $region5: #{tpu_custom_call.1} parent=1 // pred_fallthru
      _
    // Predicated region
    $region6: #{tpu_custom_call.1} parent=1 // pred_check
      _
    $region7: #{tpu_custom_call.1} parent=1 // pred_check_branch
      %22 = sbr.rel (0) target = $region9
    $region8: #{tpu_custom_call.1} parent=1 // pred_region
      %s24 = ssub.s32 128, 128
      %25 = vsyncadd [#allocation6], %s24
      %s27 = sshll.u32 [#allocation5], 4
      %s28 = int_to_ptr.vmem [resolvable:$true] %s27
      %30 = dma.hbm_to_vmem [thread:$0]  %s1, 128, %s28, [#allocation6]
    $region9: #{tpu_custom_call.1} parent=1 // pred_fallthru
      _
    // Predicated region
    $region10: #{tpu_custom_call.1} parent=1 // pred_check
      _
    $region11: #{tpu_custom_call.1} parent=1 // pred_check_branch
      %32 = sbr.rel (0) target = $region13
    $region12: #{tpu_custom_call.1} parent=1 // pred_region
      _
    $region13: #{tpu_custom_call.1} parent=1 // pred_fallthru
      _
    // Predicated region
    $region14: #{tpu_custom_call.1} parent=1 // pred_check
      _
    $region15: #{tpu_custom_call.1} parent=1 // pred_check_branch
      %34 = sbr.rel (0) target = $region17
    $region16: #{tpu_custom_call.1} parent=1 // pred_region
      %35 = dma.done [#allocation3], 128
    $region17: #{tpu_custom_call.1} parent=1 // pred_fallthru
      _
    // Predicated region
    $region18: #{tpu_custom_call.1} parent=1 // pred_check
      _
    $region19: #{tpu_custom_call.1} parent=1 // pred_check_branch
      %37 = sbr.rel (0) target = $region21
    $region20: #{tpu_custom_call.1} parent=1 // pred_region
      %38 = dma.done [#allocation6], 128
    $region21: #{tpu_custom_call.1} parent=1 // pred_fallthru
      _
    %v39 = vld [vmem:[#allocation2] sm:$0x1f]
    %v40 = vld [vmem:[#allocation5] sm:$0x1f]
    %v41 = vsub.f32 %v39, %v40
    %v42 = vand.u32 2147483647, %v41
    %vm43 = vcmp.lt.f32.partialorder %v42, 1.0
    %v44 = vmul.f32 %v42, 0.5
    %v45 = vmul.f32 %v44, %v42
    %v46 = vsub.f32 %v42, 0.5
    %v47 = vsel %vm43, %v45, %v46
    %vm48 = vcmask 1044480
    %v49 = vsel %vm48, %v47, 0.0
    %v50 = vrot.slane %v49, 4
    %v51 = vadd.f32 %v49, %v50
    %v52 = vrot.slane %v51, 2
    %v53 = vadd.f32 %v51, %v52
    %v54 = vrot.slane %v53, 1
    %v55 = vadd.f32 %v53, %v54
    %v56 = vld [vmem:[%s2] sm:$0x1]
    %v57 = vmul.f32 %v55, %v56
    %58 = vst [vmem:[#allocation7] sm:$0x1] %v57
    // Predicated region
    $region22: #{tpu_custom_call.1} parent=1 // pred_check
      _
    $region23: #{tpu_custom_call.1} parent=1 // pred_check_branch
      %60 = sbr.rel (0) target = $region25
    $region24: #{tpu_custom_call.1} parent=1 // pred_region
      %s62 = ssub.s32 16, 16
      %63 = vsyncadd [#allocation4], %s62
      %s65 = sshll.u32 [#allocation7], 4
      %s66 = int_to_ptr.vmem [resolvable:$true] %s65
      %68 = dma.vmem_to_hbm [thread:$0]  %s66, 16, %s3, [#allocation4]
    $region25: #{tpu_custom_call.1} parent=1 // pred_fallthru
      _
    // Predicated region
    $region26: #{tpu_custom_call.1} parent=1 // pred_check
      _
    $region27: #{tpu_custom_call.1} parent=1 // pred_check_branch
      %70 = sbr.rel (0) target = $region29
    $region28: #{tpu_custom_call.1} parent=1 // pred_region
      %71 = dma.done [#allocation4], 16
    $region29: #{tpu_custom_call.1} parent=1 // pred_fallthru
      _
    %72 = vsyncpa [#allocation3], 1
    %73 = vsyncpa [#allocation6], 1
    %74 = vsyncpa [#allocation4], 1

</llo_original>
